<compile_context>
chip_gen: v6e
topology: v6e:2x2x1
jax: 0.10.0
libtpu: 0.0.40
codegen_flags: <defaults>
</compile_context>

<pallas_src>
import functools
import math

import jax
import jax.numpy as jnp
from jax import lax
from jax.experimental import pallas as pl
from jax.experimental.pallas import tpu as pltpu


# --------------------------------------------------------------------------- #
# Kernel
# --------------------------------------------------------------------------- #
def _flash_attn_kernel(q_ref, k_ref, v_ref, o_ref, m_sc, l_sc, acc_sc, *,
                       scale_sq, exp_dtype):
    # q_ref/o_ref: (bh, C, tq); k_ref/v_ref: (bh, C, tk)
    s = pl.program_id(2)

    @pl.when(s == 0)
    def _():
        m_sc[...] = jnp.full(m_sc.shape, -jnp.inf, m_sc.dtype)
        l_sc[...] = jnp.zeros(l_sc.shape, l_sc.dtype)
        acc_sc[...] = jnp.zeros(acc_sc.shape, acc_sc.dtype)

    q = q_ref[...] * scale_sq          # both softmax scales folded into q (native dtype)
    k = k_ref[...]
    v = v_ref[...]

    # Transposed logits: wT[b, s, t] = sum_c k[b, c, s] * q[b, c, t].
    # The (s, t) orientation keeps the softmax reduction on the sublane axis and
    # makes the PV matmul below transpose-free / MXU-native.
    wT = lax.dot_general(
        k, q,
        dimension_numbers=(((1,), (1,)), ((0,), (0,))),
        preferred_element_type=jnp.float32)                 # (bh, tk, tq) f32

    # Online softmax over the key axis (axis=1), accumulation kept in f32.
    m_prev = m_sc[...]
    m_new = jnp.maximum(m_prev, jnp.max(wT, axis=1, keepdims=True))   # (bh,1,tq)
    alpha = jnp.exp(m_prev - m_new)                                   # (bh,1,tq)
    p = jnp.exp((wT - m_new).astype(exp_dtype))      # bf16 exp on bf16 inputs (EUP)
    l_sc[...] = alpha * l_sc[...] + jnp.sum(
        p.astype(jnp.float32), axis=1, keepdims=True)

    # Un-normalized PV: (bh, C, tq), contraction over tk (MXU-native, K = tk).
    pv = lax.dot_general(
        v, p.astype(v.dtype),
        dimension_numbers=(((2,), (1,)), ((0,), (0,))),
        preferred_element_type=jnp.float32)
    acc_sc[...] = alpha * acc_sc[...] + pv
    m_sc[...] = m_new

    @pl.when(s == pl.num_programs(2) - 1)
    def _():
        # Deferred normalization: one (bh,1,tq) reciprocal + (bh,C,tq) multiply.
        # approx=False keeps the f32 1e-5 self-test tolerance; approx=True is a
        # free EUP win if looser accuracy is acceptable.
        inv_l = pl.reciprocal(l_sc[...], approx=False)
        o_ref[...] = (acc_sc[...] * inv_l).astype(o_ref.dtype)


# --------------------------------------------------------------------------- #
# Tiling / budget selection
# --------------------------------------------------------------------------- #
def _device_vmem_bytes():
    """Per-TensorCore VMEM capacity; conservative fallback if the query fails."""
    try:
        info = pltpu.get_tpu_info()
        cap = int(getattr(info, "vmem_capacity_bytes", 0) or 0)
        if cap > 0:
            return cap
    except Exception:
        pass
    return 64 << 20  # v7x per-TC VMEM -- smallest across supported generations


def _lane_tile(dim, cap):
    """Valid lane-dim block sizes: the full dim, or a multiple of 128 dividing it.
    Return the largest candidate <= cap; if none, the smallest valid one."""
    cands = {dim}
    m = 128
    while m < dim:
        if dim % m == 0:
            cands.add(m)
        m += 128
    ok = sorted((c for c in cands if c <= cap), reverse=True)
    return ok[0] if ok else min(cands)


def _choose_tiling(B, C, Tq, Tk, itemsize, budget_bytes, tq_cap=512, tk_cap=512):
    """Pick (bh, tq, tk) so the per-step VMEM footprint fits `budget_bytes`,
    preferring an even parallel grid extent (v7x has 2 TensorCores)."""
    tq = _lane_tile(Tq, tq_cap)
    tk = _lane_tile(Tk, tk_cap)
    f32 = 4

    def footprint(bh):
        io = 2 * bh * C * (2 * tq + 2 * tk) * itemsize   # double-buffered q,k,v,out
        scratch = bh * (C * tq + 2 * tq) * f32           # acc, m, l
        inter = bh * tk * tq * (2 * f32 + itemsize)      # logits f32, exp(p), p cast
        inter += bh * C * tq * (itemsize + f32)          # scaled-q copy, f32 pv
        return io + scratch + inter

    choice = None
    for bh in sorted((d for d in range(1, B + 1) if B % d == 0), reverse=True):
        if footprint(bh) > budget_bytes:
            continue
        if choice is None:
            choice = bh
        par = (B // bh) * (Tq // tq)
        if par >= 2 and par % 2 == 0:        # even parallel extent -> both TCs busy
            choice = bh
            break
    if choice is None:
        return None
    return choice, tq, tk, footprint(choice)


# --------------------------------------------------------------------------- #
# Host-side wrappers
# --------------------------------------------------------------------------- #
def _xla_attention(q, k, v, scale):
    # Plain-XLA fallback for shapes whose smallest tiling exceeds the VMEM budget.
    w = jnp.einsum('bct,bcs->bts', q * scale, k * scale)
    w = jax.nn.softmax(w.astype(jnp.float32), axis=-1)
    return jnp.einsum('bts,bcs->bct', w, v).astype(q.dtype)


def _pallas_attention(q, k, v, scale):
    # q: (B, C, Tq); k, v: (B, C, Tk)   with B = bs * n_heads
    B, C, Tq = q.shape
    Bk, Ck, Tk = k.shape
    assert k.shape == v.shape and Bk == B and Ck == C

    itemsize = jnp.dtype(q.dtype).itemsize
    vmem_cap = _device_vmem_bytes()
    budget = int(vmem_cap * 0.70)             # headroom for compiler scratch etc.
    tiling = _choose_tiling(B, C, Tq, Tk, itemsize, budget)
    if tiling is None:
        return _xla_attention(q, k, v, scale)
    bh, tq, tk, fp = tiling

    grid = (B // bh, Tq // tq, Tk // tk)
    scale_sq = float(scale) * float(scale)
    exp_dtype = jnp.bfloat16 if q.dtype == jnp.bfloat16 else jnp.float32

    kernel = functools.partial(_flash_attn_kernel, scale_sq=scale_sq,
                               exp_dtype=exp_dtype)

    q_spec = pl.BlockSpec((bh, C, tq), lambda b, t, s: (b, 0, t))
    k_spec = pl.BlockSpec((bh, C, tk), lambda b, t, s: (b, 0, s))
    v_spec = pl.BlockSpec((bh, C, tk), lambda b, t, s: (b, 0, s))
    o_spec = pl.BlockSpec((bh, C, tq), lambda b, t, s: (b, 0, t))

    vmem_limit = int(min(vmem_cap * 0.85, max(32 << 20, 2 * fp)))
    nt = Tq // tq
    cost = pl.CostEstimate(
        flops=int(4 * B * C * Tq * Tk),               # two matmuls, 2*C*Tq*Tk each
        transcendentals=int(B * Tq * Tk),             # exp on the logits
        bytes_accessed=int(itemsize * (2 * B * C * Tq + 2 * nt * B * C * Tk)),
    )

    return pl.pallas_call(
        kernel,
        out_shape=jax.ShapeDtypeStruct((B, C, Tq), q.dtype),
        grid_spec=pltpu.PrefetchScalarGridSpec(
            num_scalar_prefetch=0,
            grid=grid,
            in_specs=[q_spec, k_spec, v_spec],
            out_specs=o_spec,
            scratch_shapes=[
                pltpu.VMEM((bh, 1, tq), jnp.float32),   # running max  m
                pltpu.VMEM((bh, 1, tq), jnp.float32),   # running sum  l
                pltpu.VMEM((bh, C, tq), jnp.float32),   # un-normalized acc
            ]),
        compiler_params=pltpu.CompilerParams(
            dimension_semantics=("parallel", "parallel", "arbitrary"),
            vmem_limit_bytes=vmem_limit,
        ),
        cost_estimate=cost,
    )(q, k, v)


def qkv_attention_legacy(qkv, n_heads, key=None, value=None):
    """JAX/Pallas equivalent of QKVAttentionLegacy.forward.

    :param qkv: [N, H*3*C, T] array of Qs, Ks, Vs.
    :return: (a, k, v) with a: [N, H*C, T], k/v: [N*H, C, Tk].
    """
    bs, width, length = qkv.shape
    assert width % (3 * n_heads) == 0
    ch = width // (3 * n_heads)

    x = qkv.reshape(bs * n_heads, ch * 3, length)
    q = x[:, 0 * ch:1 * ch, :]
    k = x[:, 1 * ch:2 * ch, :]
    v = x[:, 2 * ch:3 * ch, :]
    if key is not None and value is not None:
        k, v = key, value
        assert k.shape == v.shape, "key/value must have identical shapes"
        assert k.shape[0] == bs * n_heads and k.shape[1] == ch, (
            "external key/value must be [bs*heads, ch, Tk]")

    scale = 1.0 / math.sqrt(math.sqrt(ch))
    a = _pallas_attention(q, k, v, scale)              # (bs*H, C, T)
    return a.reshape(bs, -1, length), k, v


def _reference_attn(q, k, v, scale):
    # pure-jnp reference mirroring the PyTorch code
    w = jnp.einsum('bct,bcs->bts', q * scale, k * scale)
    w = jax.nn.softmax(w.astype(jnp.float32), axis=-1)
    return jnp.einsum('bts,bcs->bct', w, v)


# --------------------------------------------------------------------------- #
# Self-test
# --------------------------------------------------------------------------- #
if __name__ == "__main__":
    rng = jax.random.PRNGKey(0)
    r1, r2, r3, r4 = jax.random.split(rng, 4)

    # --- 1. module-scale shapes: N=2, heads=2, ch=8, T=16 ---
    N, H, C, T = 2, 2, 8, 16
    qkv = jax.random.normal(r1, (N, H * 3 * C, T), dtype=jnp.float32)
    a, k, v = qkv_attention_legacy(qkv, n_heads=H)
    a = jax.block_until_ready(a)

    x = qkv.reshape(N * H, 3 * C, T)
    q_r, k_r, v_r = x[:, :C], x[:, C:2 * C], x[:, 2 * C:]
    scale = 1.0 / math.sqrt(math.sqrt(C))
    a_ref = _reference_attn(q_r, k_r, v_r, scale).reshape(N, H * C, T)
    assert a.shape == (N, H * C, T)
    assert jnp.allclose(a, a_ref, atol=1e-5, rtol=1e-5)
    assert jnp.allclose(k, k_r) and jnp.allclose(v, v_r)

    # --- 2. external key/value path with a different KV length ---
    Tk = 32
    k_ext = jax.random.normal(r2, (N * H, C, Tk), dtype=jnp.float32)
    v_ext = jax.random.normal(r3, (N * H, C, Tk), dtype=jnp.float32)
    a2, _, _ = qkv_attention_legacy(qkv, n_heads=H, key=k_ext, value=v_ext)
    a2 = jax.block_until_ready(a2)
    a2_ref = _reference_attn(q_r, k_ext, v_ext, scale).reshape(N, H * C, T)
    assert jnp.allclose(a2, a2_ref, atol=1e-5, rtol=1e-5)

    # --- 3. moderate shape exercising Tq tiling + online softmax over Tk ---
    N3, H3, C3, T3 = 2, 4, 64, 1024
    qkv3 = jax.random.normal(r4, (N3, H3 * 3 * C3, T3), dtype=jnp.float32)
    a3, _, _ = qkv_attention_legacy(qkv3, n_heads=H3)
    a3 = jax.block_until_ready(a3)
    x3 = qkv3.reshape(N3 * H3, 3 * C3, T3)
    q3, k3, v3 = x3[:, :C3], x3[:, C3:2 * C3], x3[:, 2 * C3:]
    scale3 = 1.0 / math.sqrt(math.sqrt(C3))
    a3_ref = _reference_attn(q3, k3, v3, scale3).reshape(N3, H3 * C3, T3)
    assert jnp.allclose(a3, a3_ref, atol=1e-4, rtol=1e-4)

    print("KERNEL_OK")
</pallas_src>

<mosaic_0001>
module attributes {stable_mosaic.version = 11 : i64} {
  func.func @_flash_attn_kernel(%arg0: i32, %arg1: i32, %arg2: i32, %arg3: memref<2x8x16xf32, #tpu.memory_space<vmem>>, %arg4: memref<2x8x16xf32, #tpu.memory_space<vmem>>, %arg5: memref<2x8x16xf32, #tpu.memory_space<vmem>>, %arg6: memref<2x8x16xf32, #tpu.memory_space<vmem>>, %arg7: memref<2x1x16xf32, #tpu.memory_space<vmem>>, %arg8: memref<2x1x16xf32, #tpu.memory_space<vmem>>, %arg9: memref<2x8x16xf32, #tpu.memory_space<vmem>>) attributes {dimension_semantics = [#tpu.dimension_semantics<parallel>, #tpu.dimension_semantics<parallel>, #tpu.dimension_semantics<arbitrary>], iteration_bounds = array<i64: 2, 1, 1>, scalar_prefetch = 0 : i64, scratch_operands = 3 : i64, tpu.core_type = #tpu.core_type<tc>, window_params = [{transform_indices = @transform_0, window_bounds = array<i64: 2, 8, 16>}, {transform_indices = @transform_1, window_bounds = array<i64: 2, 8, 16>}, {transform_indices = @transform_2, window_bounds = array<i64: 2, 8, 16>}, {transform_indices = @transform_3, window_bounds = array<i64: 2, 8, 16>}]} {
    %c0_i32 = arith.constant 0 : i32
    %0 = arith.cmpi eq, %arg2, %c0_i32 : i32
    %1 = arith.extui %0 : i1 to i32
    %c0_i32_0 = arith.constant 0 : i32
    %2 = arith.cmpi ne, %1, %c0_i32_0 : i32
    scf.if %2 {
      %cst_33 = arith.constant 0xFF800000 : f32
      %34 = vector.broadcast %cst_33 : f32 to vector<2x1x16xf32>
      %c0_34 = arith.constant 0 : index
      %c0_35 = arith.constant 0 : index
      %c0_36 = arith.constant 0 : index
      %35 = vector.load %arg7[%c0_34, %c0_35, %c0_36] : memref<2x1x16xf32, #tpu.memory_space<vmem>>, vector<2x1x16xf32>
      tpu.vector_store %arg7[%c0_34, %c0_35, %c0_36], %34 {strides = array<i32>} : memref<2x1x16xf32, #tpu.memory_space<vmem>>, vector<2x1x16xf32>,
      %cst_37 = arith.constant 0.000000e+00 : f32
      %36 = vector.broadcast %cst_37 : f32 to vector<2x1x16xf32>
      %c0_38 = arith.constant 0 : index
      %c0_39 = arith.constant 0 : index
      %c0_40 = arith.constant 0 : index
      %37 = vector.load %arg8[%c0_38, %c0_39, %c0_40] : memref<2x1x16xf32, #tpu.memory_space<vmem>>, vector<2x1x16xf32>
      tpu.vector_store %arg8[%c0_38, %c0_39, %c0_40], %36 {strides = array<i32>} : memref<2x1x16xf32, #tpu.memory_space<vmem>>, vector<2x1x16xf32>,
      %cst_41 = arith.constant 0.000000e+00 : f32
      %38 = vector.broadcast %cst_41 : f32 to vector<2x8x16xf32>
      %c0_42 = arith.constant 0 : index
      %c0_43 = arith.constant 0 : index
      %c0_44 = arith.constant 0 : index
      %39 = vector.load %arg9[%c0_42, %c0_43, %c0_44] : memref<2x8x16xf32, #tpu.memory_space<vmem>>, vector<2x8x16xf32>
      tpu.vector_store %arg9[%c0_42, %c0_43, %c0_44], %38 {strides = array<i32>} : memref<2x8x16xf32, #tpu.memory_space<vmem>>, vector<2x8x16xf32>,
    } else {
    }
    %c0 = arith.constant 0 : index
    %c0_1 = arith.constant 0 : index
    %c0_2 = arith.constant 0 : index
    %3 = vector.load %arg3[%c0, %c0_1, %c0_2] : memref<2x8x16xf32, #tpu.memory_space<vmem>>, vector<2x8x16xf32>
    %cst = arith.constant 0.353553385 : f32
    %4 = vector.broadcast %cst : f32 to vector<2x8x16xf32>
    %5 = arith.mulf %3, %4 : vector<2x8x16xf32>
    %c0_3 = arith.constant 0 : index
    %c0_4 = arith.constant 0 : index
    %c0_5 = arith.constant 0 : index
    %6 = vector.load %arg4[%c0_3, %c0_4, %c0_5] : memref<2x8x16xf32, #tpu.memory_space<vmem>>, vector<2x8x16xf32>
    %c0_6 = arith.constant 0 : index
    %c0_7 = arith.constant 0 : index
    %c0_8 = arith.constant 0 : index
    %7 = vector.load %arg5[%c0_6, %c0_7, %c0_8] : memref<2x8x16xf32, #tpu.memory_space<vmem>>, vector<2x8x16xf32>
    %cst_9 = arith.constant dense<0.000000e+00> : vector<2x16x16xf32>
    %8 = tpu.matmul %6, %5, %cst_9 {dimension_numbers = #tpu.dot_dimension_numbers<[1], [1], [2], [2], [0, 0, 0, 2, 1, 2], [0], [0]>} : vector<2x8x16xf32>, vector<2x8x16xf32>, vector<2x16x16xf32> -> vector<2x16x16xf32>
    %c0_10 = arith.constant 0 : index
    %c0_11 = arith.constant 0 : index
    %c0_12 = arith.constant 0 : index
    %9 = vector.load %arg7[%c0_10, %c0_11, %c0_12] : memref<2x1x16xf32, #tpu.memory_space<vmem>>, vector<2x1x16xf32>
    %cst_13 = arith.constant dense<0xFF800000> : vector<2x16xf32>
    %10 = vector.multi_reduction <maximumf>, %8, %cst_13 [1] : vector<2x16x16xf32> to vector<2x16xf32>
    %11 = vector.shape_cast %10 : vector<2x16xf32> to vector<2x1x16xf32>
    %12 = arith.maximumf %9, %11 : vector<2x1x16xf32>
    %13 = arith.subf %9, %12 : vector<2x1x16xf32>
    %14 = math.exp %13 : vector<2x1x16xf32>
    %15 = vector.broadcast %12 : vector<2x1x16xf32> to vector<2x16x16xf32>
    %16 = arith.subf %8, %15 : vector<2x16x16xf32>
    %17 = math.exp %16 : vector<2x16x16xf32>
    %c0_14 = arith.constant 0 : index
    %c0_15 = arith.constant 0 : index
    %c0_16 = arith.constant 0 : index
    %18 = vector.load %arg8[%c0_14, %c0_15, %c0_16] : memref<2x1x16xf32, #tpu.memory_space<vmem>>, vector<2x1x16xf32>
    %19 = arith.mulf %14, %18 : vector<2x1x16xf32>
    %cst_17 = arith.constant dense<0.000000e+00> : vector<2x16xf32>
    %20 = vector.multi_reduction <add>, %17, %cst_17 [1] : vector<2x16x16xf32> to vector<2x16xf32>
    %21 = vector.shape_cast %20 : vector<2x16xf32> to vector<2x1x16xf32>
    %22 = arith.addf %19, %21 : vector<2x1x16xf32>
    %c0_18 = arith.constant 0 : index
    %c0_19 = arith.constant 0 : index
    %c0_20 = arith.constant 0 : index
    %23 = vector.load %arg8[%c0_18, %c0_19, %c0_20] : memref<2x1x16xf32, #tpu.memory_space<vmem>>, vector<2x1x16xf32>
    tpu.vector_store %arg8[%c0_18, %c0_19, %c0_20], %22 {strides = array<i32>} : memref<2x1x16xf32, #tpu.memory_space<vmem>>, vector<2x1x16xf32>,
    %cst_21 = arith.constant dense<0.000000e+00> : vector<2x8x16xf32>
    %24 = tpu.matmul %7, %17, %cst_21 {dimension_numbers = #tpu.dot_dimension_numbers<[2], [1], [1], [2], [0, 0, 0, 1, 1, 2], [0], [0]>} : vector<2x8x16xf32>, vector<2x16x16xf32>, vector<2x8x16xf32> -> vector<2x8x16xf32>
    %c0_22 = arith.constant 0 : index
    %c0_23 = arith.constant 0 : index
    %c0_24 = arith.constant 0 : index
    %25 = vector.load %arg9[%c0_22, %c0_23, %c0_24] : memref<2x8x16xf32, #tpu.memory_space<vmem>>, vector<2x8x16xf32>
    %26 = vector.broadcast %14 : vector<2x1x16xf32> to vector<2x8x16xf32>
    %27 = arith.mulf %26, %25 : vector<2x8x16xf32>
    %28 = arith.addf %27, %24 : vector<2x8x16xf32>
    %c0_25 = arith.constant 0 : index
    %c0_26 = arith.constant 0 : index
    %c0_27 = arith.constant 0 : index
    %29 = vector.load %arg9[%c0_25, %c0_26, %c0_27] : memref<2x8x16xf32, #tpu.memory_space<vmem>>, vector<2x8x16xf32>
    tpu.vector_store %arg9[%c0_25, %c0_26, %c0_27], %28 {strides = array<i32>} : memref<2x8x16xf32, #tpu.memory_space<vmem>>, vector<2x8x16xf32>,
    %c0_28 = arith.constant 0 : index
    %c0_29 = arith.constant 0 : index
    %c0_30 = arith.constant 0 : index
    %30 = vector.load %arg7[%c0_28, %c0_29, %c0_30] : memref<2x1x16xf32, #tpu.memory_space<vmem>>, vector<2x1x16xf32>
    tpu.vector_store %arg7[%c0_28, %c0_29, %c0_30], %12 {strides = array<i32>} : memref<2x1x16xf32, #tpu.memory_space<vmem>>, vector<2x1x16xf32>,
    %c0_i32_31 = arith.constant 0 : i32
    %31 = arith.cmpi eq, %arg2, %c0_i32_31 : i32
    %32 = arith.extui %31 : i1 to i32
    %c0_i32_32 = arith.constant 0 : i32
    %33 = arith.cmpi ne, %32, %c0_i32_32 : i32
    scf.if %33 {
      %c0_33 = arith.constant 0 : index
      %c0_34 = arith.constant 0 : index
      %c0_35 = arith.constant 0 : index
      %34 = vector.load %arg8[%c0_33, %c0_34, %c0_35] : memref<2x1x16xf32, #tpu.memory_space<vmem>>, vector<2x1x16xf32>
      %35 = tpu.reciprocal %34 : vector<2x1x16xf32> -> vector<2x1x16xf32>
      %c0_36 = arith.constant 0 : index
      %c0_37 = arith.constant 0 : index
      %c0_38 = arith.constant 0 : index
      %36 = vector.load %arg9[%c0_36, %c0_37, %c0_38] : memref<2x8x16xf32, #tpu.memory_space<vmem>>, vector<2x8x16xf32>
      %37 = vector.broadcast %35 : vector<2x1x16xf32> to vector<2x8x16xf32>
      %38 = arith.mulf %36, %37 : vector<2x8x16xf32>
      %c0_39 = arith.constant 0 : index
      %c0_40 = arith.constant 0 : index
      %c0_41 = arith.constant 0 : index
      %39 = vector.load %arg6[%c0_39, %c0_40, %c0_41] : memref<2x8x16xf32, #tpu.memory_space<vmem>>, vector<2x8x16xf32>
      tpu.vector_store %arg6[%c0_39, %c0_40, %c0_41], %38 {strides = array<i32>} : memref<2x8x16xf32, #tpu.memory_space<vmem>>, vector<2x8x16xf32>,
    } else {
    }
    return
  }
  func.func @transform_0(%arg0: i32, %arg1: i32, %arg2: i32) -> (i32, i32, i32) {
    %c0_i32 = arith.constant 0 : i32
    %c0_i32_0 = arith.constant 0 : i32
    return %arg0, %c0_i32, %arg1 : i32, i32, i32
  }
  func.func @transform_1(%arg0: i32, %arg1: i32, %arg2: i32) -> (i32, i32, i32) {
    %c0_i32 = arith.constant 0 : i32
    %c0_i32_0 = arith.constant 0 : i32
    return %arg0, %c0_i32, %arg2 : i32, i32, i32
  }
  func.func @transform_2(%arg0: i32, %arg1: i32, %arg2: i32) -> (i32, i32, i32) {
    %c0_i32 = arith.constant 0 : i32
    %c0_i32_0 = arith.constant 0 : i32
    return %arg0, %c0_i32, %arg2 : i32, i32, i32
  }
  func.func @transform_3(%arg0: i32, %arg1: i32, %arg2: i32) -> (i32, i32, i32) {
    %c0_i32 = arith.constant 0 : i32
    %c0_i32_0 = arith.constant 0 : i32
    return %arg0, %c0_i32, %arg1 : i32, i32, i32
  }
}

</mosaic_0001>

<llo_original>
// kernel: tpu_custom_call.1
$region0: #{tpu_custom_call.1}
  #allocation0 [shape = 'u32[]', space=smem, size = 0x4, offset = 0x4, fixed_abs, tag = 'smem constant byte address 0x4 - core index']
  #allocation1 [shape = 'u32[144,128]{1,0:T(1,128)}', space=vmem, size = 0x12000, scoped, tag = 'internal scratch']
  #allocation2 [shape = 'f32[2,1,16]{2,1,0:T(1,128)}', space=vmem, size = 0x400, scoped, tag = 'scratch operand']
  #allocation3 [shape = 'f32[2,1,16]{2,1,0:T(1,128)}', space=vmem, size = 0x400, scoped, tag = 'scratch operand']
  #allocation4 [shape = 'f32[2,8,16]{2,1,0:T(8,128)}', space=vmem, size = 0x2000, scoped, tag = 'scratch operand']
  %s0 = inlined_call_operand.hbm [shape: f32[4,8,16], index: 0, kind: input, shape index: {}]
  %s1 = inlined_call_operand.hbm [shape: f32[4,8,16], index: 1, kind: input, shape index: {}]
  %s2 = inlined_call_operand.hbm [shape: f32[4,8,16], index: 2, kind: input, shape index: {}]
  %s3 = inlined_call_operand.hbm [shape: f32[4,8,16], index: 3, kind: output, shape index: {}]
  %s4 = sld [smem:[#allocation0]]
  $region65: #{tpu_custom_call.1} parent=0
    _
  %s6 = ssub.s32 1, %s4
  %s7 = scalar_select 0, %s6, %s4
  $region1: #{tpu_custom_call.1} parent=0
    #allocation5 [shape = 'u8[16384]{0}', space=vmem, size = 0x4000, scoped, tag = 'input window, operand 0']
    #allocation6 [shape = 's32[2]{0}', space=sflag, size = 0x8, scoped, tag = 'scoped memory for tpu_custom_call.1']
    #allocation7 [shape = 's32[2]{0}', space=sflag, size = 0x8, scoped, tag = 'scoped memory for tpu_custom_call.1']
    #allocation8 [shape = 'u8[16384]{0}', space=vmem, size = 0x4000, scoped, tag = 'input window, operand 1']
    #allocation9 [shape = 's32[2]{0}', space=sflag, size = 0x8, scoped, tag = 'scoped memory for tpu_custom_call.1']
    #allocation10 [shape = 'u8[16384]{0}', space=vmem, size = 0x4000, scoped, tag = 'input window, operand 2']
    #allocation11 [shape = 'u8[16384]{0}', space=vmem, size = 0x4000, scoped, tag = 'output window, operand 0']
    %8 = vsyncpa [#allocation6], 0
    %s9 = scalar_lea.sflag [#allocation6], 1
    %10 = vsyncpa %s9, 0
    %11 = vsyncpa [#allocation9], 0
    %s12 = scalar_lea.sflag [#allocation9], 1
    %13 = vsyncpa %s12, 0
    %14 = vsyncpa [#allocation7], 0
    %s15 = scalar_lea.sflag [#allocation7], 1
    %16 = vsyncpa %s15, 0
    loop: start=0, step=1, limit=4
    $region2: #{tpu_custom_call.1} parent=1 // loop_pre_header
      _
    $region3: #{tpu_custom_call.1} parent=1 // loop_header
      %s18 = sphi 0, %s22
      %p19 = scmp.ge.s32.totalorder %s18, 4
      %s25 = sphi 0, %s44
      %s26 = sphi 0, %s40
      %s27 = sphi 0, %s36
      %s28 = sphi 0, %s25
      %s29 = sphi 0, %s26
      %s30 = sphi 0, %s27
      %s31 = sphi 0, %s28
      %s32 = sphi 0, %s29
      %s33 = sphi 0, %s30
      %s49 = sphi 0, %s51
      %s52 = sphi 0, %s49
      %s53 = sphi 0, %s52
      %s69 = sphi 0, %s53
      %s77 = sphi 0, %s79
      %s80 = sphi 0, %s77
      %s81 = sphi 0, %s80
      %s97 = sphi 0, %s81
      %s105 = sphi 0, %s107
      %s108 = sphi 0, %s105
      %s109 = sphi 0, %s108
      %s125 = sphi 0, %s109
      %s133 = sphi 0, %s135
      %s136 = sphi 0, %s133
      %s137 = sphi 0, %s136
      %s153 = sphi 0, %s137
    $region4: #{tpu_custom_call.1} parent=1 // loop_header_branch
      %21 = sbr.rel (%p19) target = $region8
    $region5: #{tpu_custom_call.1} parent=1 // loop_body
      %s23 = ssub.s32 %s18, 1
      %s24 = ssub.s32 %s18, 2
      %s34 = sadd.s32 1, %s27
      %p35 = scmp.ge.s32.totalorder %s34, 1
      %s36 = scalar_select %p35, 0, %s34
      %s37 = sadd.s32 1, %s26
      %s38 = scalar_select %p35, %s37, %s26
      %p39 = scmp.ge.s32.totalorder %s38, 1
      %s40 = scalar_select %p39, 0, %s38
      %s41 = sadd.s32 1, %s25
      %s42 = scalar_select %p39, %s41, %s25
      %p43 = scmp.ge.s32.totalorder %s42, 2
      %s44 = scalar_select %p43, 0, %s42
      %s45 = ssub.s32 %s25, %s44
      %s46 = ssub.s32 %s26, %s40
      %s47 = sor.u32 %s45, %s46
      %p48 = scmp.eq.s32.totalorder %s47, 0
      %s50 = sadd.s32 %s49, 1
      %s51 = scalar_select %p48, %s49, %s50
      %p54 = pneg %p48
      %p55 = scmp.eq.s32.totalorder %s18, 1
      %p56 = por %p54, %p55
      %p57 = scmp.ne.s32.totalorder %s49, %s52
      %p58 = scmp.eq.s32.totalorder %s18, 0
      %p59 = por %p57, %p58
      %p60 = scmp.ne.s32.totalorder %s49, %s52
      %p61 = scmp.eq.s32.totalorder %s23, 1
      %p62 = por %p60, %p61
      %p63 = scmp.ne.s32.totalorder %s52, %s53
      %p64 = scmp.eq.s32.totalorder %s23, 0
      %p65 = por %p63, %p64
      %p66 = scmp.ne.s32.totalorder %s52, %s53
      %p67 = scmp.eq.s32.totalorder %s24, 1
      %p68 = por %p66, %p67
      %p70 = scmp.ne.s32.totalorder %s53, %s69
      %p71 = scmp.eq.s32.totalorder %s24, 0
      %p72 = por %p70, %p71
      %s73 = ssub.s32 %s25, %s44
      %s74 = ssub.s32 %s27, %s36
      %s75 = sor.u32 %s73, %s74
      %p76 = scmp.eq.s32.totalorder %s75, 0
      %s78 = sadd.s32 %s77, 1
      %s79 = scalar_select %p76, %s77, %s78
      %p82 = pneg %p76
      %p83 = scmp.eq.s32.totalorder %s18, 1
      %p84 = por %p82, %p83
      %p85 = scmp.ne.s32.totalorder %s77, %s80
      %p86 = scmp.eq.s32.totalorder %s18, 0
      %p87 = por %p85, %p86
      %p88 = scmp.ne.s32.totalorder %s77, %s80
      %p89 = scmp.eq.s32.totalorder %s23, 1
      %p90 = por %p88, %p89
      %p91 = scmp.ne.s32.totalorder %s80, %s81
      %p92 = scmp.eq.s32.totalorder %s23, 0
      %p93 = por %p91, %p92
      %p94 = scmp.ne.s32.totalorder %s80, %s81
      %p95 = scmp.eq.s32.totalorder %s24, 1
      %p96 = por %p94, %p95
      %p98 = scmp.ne.s32.totalorder %s81, %s97
      %p99 = scmp.eq.s32.totalorder %s24, 0
      %p100 = por %p98, %p99
      %s101 = ssub.s32 %s25, %s44
      %s102 = ssub.s32 %s27, %s36
      %s103 = sor.u32 %s101, %s102
      %p104 = scmp.eq.s32.totalorder %s103, 0
      %s106 = sadd.s32 %s105, 1
      %s107 = scalar_select %p104, %s105, %s106
      %p110 = pneg %p104
      %p111 = scmp.eq.s32.totalorder %s18, 1
      %p112 = por %p110, %p111
      %p113 = scmp.ne.s32.totalorder %s105, %s108
      %p114 = scmp.eq.s32.totalorder %s18, 0
      %p115 = por %p113, %p114
      %p116 = scmp.ne.s32.totalorder %s105, %s108
      %p117 = scmp.eq.s32.totalorder %s23, 1
      %p118 = por %p116, %p117
      %p119 = scmp.ne.s32.totalorder %s108, %s109
      %p120 = scmp.eq.s32.totalorder %s23, 0
      %p121 = por %p119, %p120
      %p122 = scmp.ne.s32.totalorder %s108, %s109
      %p123 = scmp.eq.s32.totalorder %s24, 1
      %p124 = por %p122, %p123
      %p126 = scmp.ne.s32.totalorder %s109, %s125
      %p127 = scmp.eq.s32.totalorder %s24, 0
      %p128 = por %p126, %p127
      %s129 = ssub.s32 %s25, %s44
      %s130 = ssub.s32 %s26, %s40
      %s131 = sor.u32 %s129, %s130
      %p132 = scmp.eq.s32.totalorder %s131, 0
      %s134 = sadd.s32 %s133, 1
      %s135 = scalar_select %p132, %s133, %s134
      %p138 = pneg %p132
      %p139 = scmp.eq.s32.totalorder %s18, 1
      %p140 = por %p138, %p139
      %p141 = scmp.ne.s32.totalorder %s133, %s136
      %p142 = scmp.eq.s32.totalorder %s18, 0
      %p143 = por %p141, %p142
      %p144 = scmp.ne.s32.totalorder %s133, %s136
      %p145 = scmp.eq.s32.totalorder %s23, 1
      %p146 = por %p144, %p145
      %p147 = scmp.ne.s32.totalorder %s136, %s137
      %p148 = scmp.eq.s32.totalorder %s23, 0
      %p149 = por %p147, %p148
      %p150 = scmp.ne.s32.totalorder %s136, %s137
      %p151 = scmp.eq.s32.totalorder %s24, 1
      %p152 = por %p150, %p151
      %p154 = scmp.ne.s32.totalorder %s137, %s153
      %p155 = scmp.eq.s32.totalorder %s24, 0
      %p156 = por %p154, %p155
      %p157 = scmp.le.s32.totalorder 1, %s18
      %p158 = scmp.lt.s32.totalorder %s18, 3
      %p159 = pnand %p157, %p158
      %p160 = pneg %p159
      // Predicated region
      $region9: #{tpu_custom_call.1} parent=5 // pred_check
        _
      $region10: #{tpu_custom_call.1} parent=5 // pred_check_branch
        %162 = sbr.rel (%p159) target = $region12
      $region11: #{tpu_custom_call.1} parent=5 // pred_region
        %s163 = ssub.s32 %s18, 1
      $region12: #{tpu_custom_call.1} parent=5 // pred_fallthru
        _
      %p164 = scmp.lt.s32.totalorder %s18, 2
      // Predicated region
      $region13: #{tpu_custom_call.1} parent=5 // pred_check
        %p165 = pneg %p164
      $region14: #{tpu_custom_call.1} parent=5 // pred_check_branch
        %167 = sbr.rel (%p165) target = $region16
      $region15: #{tpu_custom_call.1} parent=5 // pred_region
        // Predicated region
        $region17: #{tpu_custom_call.1} parent=15 // pred_check
          %p168 = pneg %p59
        $region18: #{tpu_custom_call.1} parent=15 // pred_check_branch
          %170 = sbr.rel (%p168) target = $region20
        $region19: #{tpu_custom_call.1} parent=15 // pred_region
          %s171 = sand.u32 %s49, 1
          %s172 = scalar_lea.sflag [#allocation6], %s171
          %s173 = sand.u32 %s49, 1
          %s174 = smul.addr %s173, 16
          %s175 = scalar_lea.vmem [#allocation5], %s174
          %s176 = smul.u32 2, %s25
          %s178 = ssub.s32 256, 256
          %179 = vsyncadd %s172, %s178
          %s180 = sadd.s32 %s26, %s176
          %s181 = smul.addr %s180, 128
          %s182 = scalar_lea.hbm %s0, %s181
          %s183 = sshll.u32 %s175, 4
          %s184 = int_to_ptr.vmem [resolvable:$true] %s183
          %189 = dma.hbm_to_vmem [thread:$0]  %s182, 256, %s184, %s172, 128, 128, 8
        $region20: #{tpu_custom_call.1} parent=15 // pred_fallthru
          _
        // Predicated region
        $region21: #{tpu_custom_call.1} parent=15 // pred_check
          %p190 = pneg %p87
        $region22: #{tpu_custom_call.1} parent=15 // pred_check_branch
          %192 = sbr.rel (%p190) target = $region24
        $region23: #{tpu_custom_call.1} parent=15 // pred_region
          %s193 = sand.u32 %s18, 1
          %s194 = scalar_lea.sflag [#allocation9], %s193
          %s195 = sand.u32 %s77, 1
          %s196 = smul.addr %s195, 16
          %s197 = scalar_lea.vmem [#allocation8], %s196
          %s198 = smul.u32 2, %s25
          %s200 = ssub.s32 256, 256
          %201 = vsyncadd %s194, %s200
          %s202 = sadd.s32 %s27, %s198
          %s203 = smul.addr %s202, 128
          %s204 = scalar_lea.hbm %s1, %s203
          %s205 = sshll.u32 %s197, 4
          %s206 = int_to_ptr.vmem [resolvable:$true] %s205
          %211 = dma.hbm_to_vmem [thread:$0]  %s204, 256, %s206, %s194, 128, 128, 8
        $region24: #{tpu_custom_call.1} parent=15 // pred_fallthru
          _
        // Predicated region
        $region25: #{tpu_custom_call.1} parent=15 // pred_check
          %p212 = pneg %p115
        $region26: #{tpu_custom_call.1} parent=15 // pred_check_branch
          %214 = sbr.rel (%p212) target = $region28
        $region27: #{tpu_custom_call.1} parent=15 // pred_region
          %s215 = sand.u32 %s18, 1
          %s216 = scalar_lea.sflag [#allocation9], %s215
          %s217 = sand.u32 %s105, 1
          %s218 = smul.addr %s217, 16
          %s219 = scalar_lea.vmem [#allocation10], %s218
          %s220 = smul.u32 2, %s25
          %s222 = ssub.s32 256, 256
          %223 = vsyncadd %s216, %s222
          %s224 = sadd.s32 %s27, %s220
          %s225 = smul.addr %s224, 128
          %s226 = scalar_lea.hbm %s2, %s225
          %s227 = sshll.u32 %s219, 4
          %s228 = int_to_ptr.vmem [resolvable:$true] %s227
          %233 = dma.hbm_to_vmem [thread:$0]  %s226, 256, %s228, %s216, 128, 128, 8
        $region28: #{tpu_custom_call.1} parent=15 // pred_fallthru
          _
      $region16: #{tpu_custom_call.1} parent=5 // pred_fallthru
        _
      %p234 = scmp.le.s32.totalorder 1, %s18
      %p235 = scmp.lt.s32.totalorder %s18, 3
      %p236 = pnand %p234, %p235
      %p237 = pneg %p236
      // Predicated region
      $region29: #{tpu_custom_call.1} parent=5 // pred_check
        _
      $region30: #{tpu_custom_call.1} parent=5 // pred_check_branch
        %239 = sbr.rel (%p236) target = $region32
      $region31: #{tpu_custom_call.1} parent=5 // pred_region
        %s240 = ssub.s32 %s18, 1
        %s241 = sand.u32 %s52, 1
        %s242 = scalar_lea.sflag [#allocation6], %s241
        %s243 = sand.u32 %s52, 1
        %s244 = smul.addr %s243, 16
        %s245 = scalar_lea.vmem [#allocation5], %s244
        // Predicated region
        $region33: #{tpu_custom_call.1} parent=31 // pred_check
          %p246 = pneg %p65
        $region34: #{tpu_custom_call.1} parent=31 // pred_check_branch
          %248 = sbr.rel (%p246) target = $region36
        $region35: #{tpu_custom_call.1} parent=31 // pred_region
          %249 = dma.done %s242, 256
        $region36: #{tpu_custom_call.1} parent=31 // pred_fallthru
          _
        %s250 = sand.u32 %s23, 1
        %s251 = scalar_lea.sflag [#allocation9], %s250
        %s252 = sand.u32 %s80, 1
        %s253 = smul.addr %s252, 16
        %s254 = scalar_lea.vmem [#allocation8], %s253
        // Predicated region
        $region37: #{tpu_custom_call.1} parent=31 // pred_check
          %p255 = pneg %p93
        $region38: #{tpu_custom_call.1} parent=31 // pred_check_branch
          %257 = sbr.rel (%p255) target = $region40
        $region39: #{tpu_custom_call.1} parent=31 // pred_region
          %258 = dma.done %s251, 256
        $region40: #{tpu_custom_call.1} parent=31 // pred_fallthru
          _
        %s259 = sand.u32 %s23, 1
        %s260 = scalar_lea.sflag [#allocation9], %s259
        %s261 = sand.u32 %s108, 1
        %s262 = smul.addr %s261, 16
        %s263 = scalar_lea.vmem [#allocation10], %s262
        // Predicated region
        $region41: #{tpu_custom_call.1} parent=31 // pred_check
          %p264 = pneg %p121
        $region42: #{tpu_custom_call.1} parent=31 // pred_check_branch
          %266 = sbr.rel (%p264) target = $region44
        $region43: #{tpu_custom_call.1} parent=31 // pred_region
          %267 = dma.done %s260, 256
        $region44: #{tpu_custom_call.1} parent=31 // pred_fallthru
          _
        %s268 = sand.u32 %s52, 1
        %s269 = scalar_lea.sflag [#allocation6], %s268
        %s270 = sand.u32 %s52, 1
        %s271 = smul.addr %s270, 16
        %s272 = scalar_lea.vmem [#allocation5], %s271
        %p273 = pneg %p65
        %p274 = pneg %p62
        %s275 = sand.u32 %s23, 1
        %s276 = scalar_lea.sflag [#allocation9], %s275
        %s277 = sand.u32 %s80, 1
        %s278 = smul.addr %s277, 16
        %s279 = scalar_lea.vmem [#allocation8], %s278
        %p280 = pneg %p93
        %p281 = pneg %p90
        %s282 = sand.u32 %s23, 1
        %s283 = scalar_lea.sflag [#allocation9], %s282
        %s284 = sand.u32 %s108, 1
        %s285 = smul.addr %s284, 16
        %s286 = scalar_lea.vmem [#allocation10], %s285
        %p287 = pneg %p121
        %p288 = pneg %p118
        %p289 = pneg %p149
        %p290 = pneg %p146
        %s291 = sand.u32 %s136, 1
        %s292 = scalar_lea.sflag [#allocation7], %s291
        %s293 = sand.u32 %s136, 1
        %s294 = smul.addr %s293, 16
        %s295 = scalar_lea.vmem [#allocation11], %s294
        %s296 = smul.u32 2, %s28
        %s297 = smul.u32 2, %s28
        %s298 = smul.u32 2, %s28
        %s299 = smul.u32 2, %s28
        %p300 = scmp.eq.s32.totalorder %s30, 0
        // Predicated region
        $region45: #{tpu_custom_call.1} parent=31 // pred_check
          %p301 = pneg %p300
        $region46: #{tpu_custom_call.1} parent=31 // pred_check_branch
          %303 = sbr.rel (%p301) target = $region48
        $region47: #{tpu_custom_call.1} parent=31 // pred_region
          %vm304 = vcmask 122880
          %305 = vst.msk [vmem:[#allocation2] sm:$0x1] %vm304, -inf
          %306 = vst.msk [vmem:[#allocation2 + $0x1] sm:$0x1] %vm304, -inf
          %307 = vst.msk [vmem:[#allocation3] sm:$0x1] %vm304, 0.0
          %308 = vst.msk [vmem:[#allocation3 + $0x1] sm:$0x1] %vm304, 0.0
          %vm309 = vcmask 130048
          %310 = vst.msk [vmem:[#allocation4] sm:$0xff] %vm309, 0.0
          %311 = vst.msk [vmem:[#allocation4 + $0x8] sm:$0xff] %vm309, 0.0
        $region48: #{tpu_custom_call.1} parent=31 // pred_fallthru
          _
        %v312 = vld [vmem:[%s245] sm:$0xff]
        %v313 = vld [vmem:[%s245 + $0x8] sm:$0xff]
        %v314 = vmul.f32 %v312, 0.35355338
        %v315 = vmul.f32 %v313, 0.35355338
        %v316 = vld [vmem:[%s254] sm:$0xff]
        %v317 = vld [vmem:[%s254 + $0x8] sm:$0xff]
        %v318 = vld [vmem:[%s263] sm:$0xff]
        %v319 = vld [vmem:[%s263 + $0x8] sm:$0xff]
        %320 = vxpose.xlu0.b32.start [1/16] %v316, 128
        %321 = vxpose.xlu0.b32.cont [2/16] 0.0, 128
        %322 = vxpose.xlu0.b32.cont [3/16] 0.0, 128
        %323 = vxpose.xlu0.b32.cont [4/16] 0.0, 128
        %324 = vxpose.xlu0.b32.cont [5/16] 0.0, 128
        %325 = vxpose.xlu0.b32.cont [6/16] 0.0, 128
        %326 = vxpose.xlu0.b32.cont [7/16] 0.0, 128
        %327 = vxpose.xlu0.b32.cont [8/16] 0.0, 128
        %328 = vxpose.xlu0.b32.cont [9/16] 0.0, 128
        %329 = vxpose.xlu0.b32.cont [10/16] 0.0, 128
        %330 = vxpose.xlu0.b32.cont [11/16] 0.0, 128
        %331 = vxpose.xlu0.b32.cont [12/16] 0.0, 128
        %332 = vxpose.xlu0.b32.cont [13/16] 0.0, 128
        %333 = vxpose.xlu0.b32.cont [14/16] 0.0, 128
        %334 = vxpose.xlu0.b32.cont [15/16] 0.0, 128
        %335 = vxpose.xlu0.b32.end [16/16] 0.0, 128
        %v336 = vpop.trf.xlu0
        %v337 = vpop.trf.xlu0
        %v338 = vpop.trf.xlu0
        %v339 = vpop.trf.xlu0
        %v340 = vpop.trf.xlu0
        %v341 = vpop.trf.xlu0
        %v342 = vpop.trf.xlu0
        %v343 = vpop.trf.xlu0
        %v344 = vpop.trf.xlu0
        %v345 = vpop.trf.xlu0
        %v346 = vpop.trf.xlu0
        %v347 = vpop.trf.xlu0
        %v348 = vpop.trf.xlu0
        %v349 = vpop.trf.xlu0
        %v350 = vpop.trf.xlu0
        %v351 = vpop.trf.xlu0
        %vm352 = vcmask 64512
        %v354 = vsel %vm352, %v336, 0
        %v357 = vsel %vm352, %v337, 0
        %359 = vmatprep.subr.mxu0 0.0
        %360 = vmatpush1.msra.mxu0 0.0
        %361 = vmatprep.subr.mxu0 0.0
        %362 = vmatpush1.msra.mxu0 0.0
        %363 = vmatprep.subr.mxu0 0.0
        %364 = vmatpush1.msra.mxu0 0.0
        %365 = vmatprep.subr.mxu0 0.0
        %366 = vmatpush1.msra.mxu0 0.0
        %367 = vmatprep.subr.mxu0 0.0
        %368 = vmatpush1.msra.mxu0 0.0
        %369 = vmatprep.subr.mxu0 0.0
        %370 = vmatpush1.msra.mxu0 0.0
        %371 = vmatprep.subr.mxu0 0.0
        %372 = vmatpush1.msra.mxu0 0.0
        %373 = vmatprep.subr.mxu0 0.0
        %374 = vmatpush1.msra.mxu0 0.0
        %375 = vmatprep.subr.mxu0 0.0
        %376 = vmatpush1.msra.mxu0 0.0
        %377 = vmatprep.subr.mxu0 0.0
        %378 = vmatpush1.msra.mxu0 0.0
        %379 = vmatprep.subr.mxu0 0.0
        %380 = vmatpush1.msra.mxu0 0.0
        %381 = vmatprep.subr.mxu0 0.0
        %382 = vmatpush1.msra.mxu0 0.0
        %383 = vmatprep.subr.mxu0 0.0
        %384 = vmatpush1.msra.mxu0 0.0
        %385 = vmatprep.subr.mxu0 0.0
        %386 = vmatpush1.msra.mxu0 0.0
        %387 = vmatprep.subr.mxu0 0.0
        %388 = vmatpush1.msra.mxu0 0.0
        %389 = vmatprep.subr.mxu0 0.0
        %390 = vmatpush1.msra.mxu0 %v314
        %391 = vmatprep.subr.mxu0 0.0
        %392 = vmatpush2.msra.mxu0 0.0
        %393 = vmatprep.subr.mxu0 0.0
        %394 = vmatpush2.msra.mxu0 0.0
        %395 = vmatprep.subr.mxu0 0.0
        %396 = vmatpush2.msra.mxu0 0.0
        %397 = vmatprep.subr.mxu0 0.0
        %398 = vmatpush2.msra.mxu0 0.0
        %399 = vmatprep.subr.mxu0 0.0
        %400 = vmatpush2.msra.mxu0 0.0
        %401 = vmatprep.subr.mxu0 0.0
        %402 = vmatpush2.msra.mxu0 0.0
        %403 = vmatprep.subr.mxu0 0.0
        %404 = vmatpush2.msra.mxu0 0.0
        %405 = vmatprep.subr.mxu0 0.0
        %406 = vmatpush2.msra.mxu0 0.0
        %407 = vmatprep.subr.mxu0 0.0
        %408 = vmatpush2.msra.mxu0 0.0
        %409 = vmatprep.subr.mxu0 0.0
        %410 = vmatpush2.msra.mxu0 0.0
        %411 = vmatprep.subr.mxu0 0.0
        %412 = vmatpush2.msra.mxu0 0.0
        %413 = vmatprep.subr.mxu0 0.0
        %414 = vmatpush2.msra.mxu0 0.0
        %415 = vmatprep.subr.mxu0 0.0
        %416 = vmatpush2.msra.mxu0 0.0
        %417 = vmatprep.subr.mxu0 0.0
        %418 = vmatpush2.msra.mxu0 0.0
        %419 = vmatprep.subr.mxu0 0.0
        %420 = vmatpush2.msra.mxu0 0.0
        %421 = vmatprep.subr.mxu0 0.0
        %422 = vmatpush2.msra.mxu0 0.0
        %423 = vmatprep.mubr.f32.mxu0 0.0
        %424 = vmatmul.mubr.f32.gmra.mxu0 %v354
        %v425 = vpop.f32.mrf.mxu0
        %v426 = vadd.f32 0.0, %v425
        %v427 = vpop.f32.mrf.mxu0
        %428 = vmatprep.mubr.f32.mxu0 0.0
        %429 = vmatmul.mubr.f32.gmra.mxu0 %v357
        %v430 = vpop.f32.mrf.mxu0
        %v431 = vadd.f32 0.0, %v430
        %v432 = vpop.f32.mrf.mxu0
        %433 = vdwg.mxu0
        %434 = vxpose.xlu0.b32.start [1/16] %v317, 128
        %435 = vxpose.xlu0.b32.cont [2/16] 0.0, 128
        %436 = vxpose.xlu0.b32.cont [3/16] 0.0, 128
        %437 = vxpose.xlu0.b32.cont [4/16] 0.0, 128
        %438 = vxpose.xlu0.b32.cont [5/16] 0.0, 128
        %439 = vxpose.xlu0.b32.cont [6/16] 0.0, 128
        %440 = vxpose.xlu0.b32.cont [7/16] 0.0, 128
        %441 = vxpose.xlu0.b32.cont [8/16] 0.0, 128
        %442 = vxpose.xlu0.b32.cont [9/16] 0.0, 128
        %443 = vxpose.xlu0.b32.cont [10/16] 0.0, 128
        %444 = vxpose.xlu0.b32.cont [11/16] 0.0, 128
        %445 = vxpose.xlu0.b32.cont [12/16] 0.0, 128
        %446 = vxpose.xlu0.b32.cont [13/16] 0.0, 128
        %447 = vxpose.xlu0.b32.cont [14/16] 0.0, 128
        %448 = vxpose.xlu0.b32.cont [15/16] 0.0, 128
        %449 = vxpose.xlu0.b32.end [16/16] 0.0, 128
        %v450 = vpop.trf.xlu0
        %v451 = vpop.trf.xlu0
        %v452 = vpop.trf.xlu0
        %v453 = vpop.trf.xlu0
        %v454 = vpop.trf.xlu0
        %v455 = vpop.trf.xlu0
        %v456 = vpop.trf.xlu0
        %v457 = vpop.trf.xlu0
        %v458 = vpop.trf.xlu0
        %v459 = vpop.trf.xlu0
        %v460 = vpop.trf.xlu0
        %v461 = vpop.trf.xlu0
        %v462 = vpop.trf.xlu0
        %v463 = vpop.trf.xlu0
        %v464 = vpop.trf.xlu0
        %v465 = vpop.trf.xlu0
        %v467 = vsel %vm352, %v450, 0
        %v470 = vsel %vm352, %v451, 0
        %472 = vmatprep.subr.mxu0 0.0
        %473 = vmatpush1.msra.mxu0 0.0
        %474 = vmatprep.subr.mxu0 0.0
        %475 = vmatpush1.msra.mxu0 0.0
        %476 = vmatprep.subr.mxu0 0.0
        %477 = vmatpush1.msra.mxu0 0.0
        %478 = vmatprep.subr.mxu0 0.0
        %479 = vmatpush1.msra.mxu0 0.0
        %480 = vmatprep.subr.mxu0 0.0
        %481 = vmatpush1.msra.mxu0 0.0
        %482 = vmatprep.subr.mxu0 0.0
        %483 = vmatpush1.msra.mxu0 0.0
        %484 = vmatprep.subr.mxu0 0.0
        %485 = vmatpush1.msra.mxu0 0.0
        %486 = vmatprep.subr.mxu0 0.0
        %487 = vmatpush1.msra.mxu0 0.0
        %488 = vmatprep.subr.mxu0 0.0
        %489 = vmatpush1.msra.mxu0 0.0
        %490 = vmatprep.subr.mxu0 0.0
        %491 = vmatpush1.msra.mxu0 0.0
        %492 = vmatprep.subr.mxu0 0.0
        %493 = vmatpush1.msra.mxu0 0.0
        %494 = vmatprep.subr.mxu0 0.0
        %495 = vmatpush1.msra.mxu0 0.0
        %496 = vmatprep.subr.mxu0 0.0
        %497 = vmatpush1.msra.mxu0 0.0
        %498 = vmatprep.subr.mxu0 0.0
        %499 = vmatpush1.msra.mxu0 0.0
        %500 = vmatprep.subr.mxu0 0.0
        %501 = vmatpush1.msra.mxu0 0.0
        %502 = vmatprep.subr.mxu0 0.0
        %503 = vmatpush1.msra.mxu0 %v315
        %504 = vmatprep.subr.mxu0 0.0
        %505 = vmatpush2.msra.mxu0 0.0
        %506 = vmatprep.subr.mxu0 0.0
        %507 = vmatpush2.msra.mxu0 0.0
        %508 = vmatprep.subr.mxu0 0.0
        %509 = vmatpush2.msra.mxu0 0.0
        %510 = vmatprep.subr.mxu0 0.0
        %511 = vmatpush2.msra.mxu0 0.0
        %512 = vmatprep.subr.mxu0 0.0
        %513 = vmatpush2.msra.mxu0 0.0
        %514 = vmatprep.subr.mxu0 0.0
        %515 = vmatpush2.msra.mxu0 0.0
        %516 = vmatprep.subr.mxu0 0.0
        %517 = vmatpush2.msra.mxu0 0.0
        %518 = vmatprep.subr.mxu0 0.0
        %519 = vmatpush2.msra.mxu0 0.0
        %520 = vmatprep.subr.mxu0 0.0
        %521 = vmatpush2.msra.mxu0 0.0
        %522 = vmatprep.subr.mxu0 0.0
        %523 = vmatpush2.msra.mxu0 0.0
        %524 = vmatprep.subr.mxu0 0.0
        %525 = vmatpush2.msra.mxu0 0.0
        %526 = vmatprep.subr.mxu0 0.0
        %527 = vmatpush2.msra.mxu0 0.0
        %528 = vmatprep.subr.mxu0 0.0
        %529 = vmatpush2.msra.mxu0 0.0
        %530 = vmatprep.subr.mxu0 0.0
        %531 = vmatpush2.msra.mxu0 0.0
        %532 = vmatprep.subr.mxu0 0.0
        %533 = vmatpush2.msra.mxu0 0.0
        %534 = vmatprep.subr.mxu0 0.0
        %535 = vmatpush2.msra.mxu0 0.0
        %536 = vmatprep.mubr.f32.mxu0 0.0
        %537 = vmatmul.mubr.f32.gmra.mxu0 %v467
        %v538 = vpop.f32.mrf.mxu0
        %v539 = vadd.f32 0.0, %v538
        %v540 = vpop.f32.mrf.mxu0
        %541 = vmatprep.mubr.f32.mxu0 0.0
        %542 = vmatmul.mubr.f32.gmra.mxu0 %v470
        %v543 = vpop.f32.mrf.mxu0
        %v544 = vadd.f32 0.0, %v543
        %v545 = vpop.f32.mrf.mxu0
        %546 = vdwg.mxu0
        %v547 = vld [vmem:[#allocation2] sm:$0x1]
        %v548 = vld [vmem:[#allocation2 + $0x1] sm:$0x1]
        %vm549 = vcmask 130048
        %v550 = vsel %vm549, %v426, -inf
        %v551 = vsel %vm549, %v431, -inf
        %v552 = vmax.f32 %v550, %v551
        %v553 = vrot.slane %v552, 4
        %v554 = vmax.f32 %v552, %v553
        %v555 = vrot.slane %v554, 2
        %v556 = vmax.f32 %v554, %v555
        %v557 = vrot.slane %v556, 1
        %v558 = vmax.f32 %v556, %v557
        %v559 = vsel %vm549, %v539, -inf
        %v560 = vsel %vm549, %v544, -inf
        %v561 = vmax.f32 %v559, %v560
        %v562 = vrot.slane %v561, 4
        %v563 = vmax.f32 %v561, %v562
        %v564 = vrot.slane %v563, 2
        %v565 = vmax.f32 %v563, %v564
        %v566 = vrot.slane %v565, 1
        %v567 = vmax.f32 %v565, %v566
        %v568 = vmax.f32 %v547, %v558
        %v569 = vmax.f32 %v548, %v567
        %v570 = vsub.f32 %v547, %v568
        %v571 = vsub.f32 %v548, %v569
        %v572 = vmul.f32 %v570, 1.442695
        %v573 = vpow.pop %v572
        %v574 = vmul.f32 %v571, 1.442695
        %v575 = vpow.pop %v574
        %v578 = vlaneseq
        %v579 = vshrl.u32 %v578, 7
        %v580 = vsub.s32 0, %v579
        %v581 = vrot.slane %v568, %v580
        %v582 = vlaneseq
        %v583 = vshrl.u32 %v582, 7
        %v584 = vsub.s32 0, %v583
        %v585 = vrot.slane %v569, %v584
        %v588 = vsub.f32 %v426, %v581
        %v589 = vsub.f32 %v431, %v581
        %v590 = vsub.f32 %v539, %v585
        %v591 = vsub.f32 %v544, %v585
        %v592 = vmul.f32 %v588, 1.442695
        %v593 = vpow.pop %v592
        %v594 = vmul.f32 %v589, 1.442695
        %v595 = vpow.pop %v594
        %v596 = vmul.f32 %v590, 1.442695
        %v597 = vpow.pop %v596
        %v598 = vmul.f32 %v591, 1.442695
        %v599 = vpow.pop %v598
        %v600 = vld [vmem:[#allocation3] sm:$0x1]
        %v601 = vld [vmem:[#allocation3 + $0x1] sm:$0x1]
        %v602 = vmul.f32 %v573, %v600
        %v603 = vmul.f32 %v575, %v601
        %v604 = vsel %vm549, %v593, 0.0
        %v605 = vsel %vm549, %v595, 0.0
        %v606 = vadd.f32 %v604, %v605
        %v607 = vrot.slane %v606, 4
        %v608 = vadd.f32 %v606, %v607
        %v609 = vrot.slane %v608, 2
        %v610 = vadd.f32 %v608, %v609
        %v611 = vrot.slane %v610, 1
        %v612 = vadd.f32 %v610, %v611
        %v613 = vsel %vm549, %v597, 0.0
        %v614 = vsel %vm549, %v599, 0.0
        %v615 = vadd.f32 %v613, %v614
        %v616 = vrot.slane %v615, 4
        %v617 = vadd.f32 %v615, %v616
        %v618 = vrot.slane %v617, 2
        %v619 = vadd.f32 %v617, %v618
        %v620 = vrot.slane %v619, 1
        %v621 = vadd.f32 %v619, %v620
        %v622 = vadd.f32 %v602, %v612
        %v623 = vadd.f32 %v603, %v621
        %vm624 = vcmask 122880
        %625 = vst.msk [vmem:[#allocation3] sm:$0x1] %vm624, %v622
        %626 = vst.msk [vmem:[#allocation3 + $0x1] sm:$0x1] %vm624, %v623
        %v628 = vsel %vm549, %v318, 0
        %630 = vmatprep.subr.mxu0 0.0
        %631 = vmatpush1.msra.mxu0 0.0
        %632 = vmatprep.subr.mxu0 0.0
        %633 = vmatpush1.msra.mxu0 0.0
        %634 = vmatprep.subr.mxu0 0.0
        %635 = vmatpush1.msra.mxu0 0.0
        %636 = vmatprep.subr.mxu0 0.0
        %637 = vmatpush1.msra.mxu0 0.0
        %638 = vmatprep.subr.mxu0 0.0
        %639 = vmatpush1.msra.mxu0 0.0
        %640 = vmatprep.subr.mxu0 0.0
        %641 = vmatpush1.msra.mxu0 0.0
        %642 = vmatprep.subr.mxu0 0.0
        %643 = vmatpush1.msra.mxu0 0.0
        %644 = vmatprep.subr.mxu0 0.0
        %645 = vmatpush1.msra.mxu0 0.0
        %646 = vmatprep.subr.mxu0 0.0
        %647 = vmatpush1.msra.mxu0 0.0
        %648 = vmatprep.subr.mxu0 0.0
        %649 = vmatpush1.msra.mxu0 0.0
        %650 = vmatprep.subr.mxu0 0.0
        %651 = vmatpush1.msra.mxu0 0.0
        %652 = vmatprep.subr.mxu0 0.0
        %653 = vmatpush1.msra.mxu0 0.0
        %654 = vmatprep.subr.mxu0 0.0
        %655 = vmatpush1.msra.mxu0 0.0
        %656 = vmatprep.subr.mxu0 0.0
        %657 = vmatpush1.msra.mxu0 0.0
        %658 = vmatprep.subr.mxu0 0.0
        %659 = vmatpush1.msra.mxu0 %v595
        %660 = vmatprep.subr.mxu0 0.0
        %661 = vmatpush1.msra.mxu0 %v593
        %662 = vmatprep.subr.mxu0 0.0
        %663 = vmatpush2.msra.mxu0 0.0
        %664 = vmatprep.subr.mxu0 0.0
        %665 = vmatpush2.msra.mxu0 0.0
        %666 = vmatprep.subr.mxu0 0.0
        %667 = vmatpush2.msra.mxu0 0.0
        %668 = vmatprep.subr.mxu0 0.0
        %669 = vmatpush2.msra.mxu0 0.0
        %670 = vmatprep.subr.mxu0 0.0
        %671 = vmatpush2.msra.mxu0 0.0
        %672 = vmatprep.subr.mxu0 0.0
        %673 = vmatpush2.msra.mxu0 0.0
        %674 = vmatprep.subr.mxu0 0.0
        %675 = vmatpush2.msra.mxu0 0.0
        %676 = vmatprep.subr.mxu0 0.0
        %677 = vmatpush2.msra.mxu0 0.0
        %678 = vmatprep.subr.mxu0 0.0
        %679 = vmatpush2.msra.mxu0 0.0
        %680 = vmatprep.subr.mxu0 0.0
        %681 = vmatpush2.msra.mxu0 0.0
        %682 = vmatprep.subr.mxu0 0.0
        %683 = vmatpush2.msra.mxu0 0.0
        %684 = vmatprep.subr.mxu0 0.0
        %685 = vmatpush2.msra.mxu0 0.0
        %686 = vmatprep.subr.mxu0 0.0
        %687 = vmatpush2.msra.mxu0 0.0
        %688 = vmatprep.subr.mxu0 0.0
        %689 = vmatpush2.msra.mxu0 0.0
        %690 = vmatprep.subr.mxu0 0.0
        %691 = vmatpush2.msra.mxu0 0.0
        %692 = vmatprep.subr.mxu0 0.0
        %693 = vmatpush2.msra.mxu0 0.0
        %694 = vmatprep.mubr.f32.mxu0 0.0
        %695 = vmatmul.mubr.f32.gmra.mxu0 %v628
        %v696 = vpop.f32.mrf.mxu0
        %v697 = vadd.f32 0.0, %v696
        %v698 = vpop.f32.mrf.mxu0
        %699 = vdwg.mxu0
        %v701 = vsel %vm549, %v319, 0
        %703 = vmatprep.subr.mxu0 0.0
        %704 = vmatpush1.msra.mxu0 0.0
        %705 = vmatprep.subr.mxu0 0.0
        %706 = vmatpush1.msra.mxu0 0.0
        %707 = vmatprep.subr.mxu0 0.0
        %708 = vmatpush1.msra.mxu0 0.0
        %709 = vmatprep.subr.mxu0 0.0
        %710 = vmatpush1.msra.mxu0 0.0
        %711 = vmatprep.subr.mxu0 0.0
        %712 = vmatpush1.msra.mxu0 0.0
        %713 = vmatprep.subr.mxu0 0.0
        %714 = vmatpush1.msra.mxu0 0.0
        %715 = vmatprep.subr.mxu0 0.0
        %716 = vmatpush1.msra.mxu0 0.0
        %717 = vmatprep.subr.mxu0 0.0
        %718 = vmatpush1.msra.mxu0 0.0
        %719 = vmatprep.subr.mxu0 0.0
        %720 = vmatpush1.msra.mxu0 0.0
        %721 = vmatprep.subr.mxu0 0.0
        %722 = vmatpush1.msra.mxu0 0.0
        %723 = vmatprep.subr.mxu0 0.0
        %724 = vmatpush1.msra.mxu0 0.0
        %725 = vmatprep.subr.mxu0 0.0
        %726 = vmatpush1.msra.mxu0 0.0
        %727 = vmatprep.subr.mxu0 0.0
        %728 = vmatpush1.msra.mxu0 0.0
        %729 = vmatprep.subr.mxu0 0.0
        %730 = vmatpush1.msra.mxu0 0.0
        %731 = vmatprep.subr.mxu0 0.0
        %732 = vmatpush1.msra.mxu0 %v599
        %733 = vmatprep.subr.mxu0 0.0
        %734 = vmatpush1.msra.mxu0 %v597
        %735 = vmatprep.subr.mxu0 0.0
        %736 = vmatpush2.msra.mxu0 0.0
        %737 = vmatprep.subr.mxu0 0.0
        %738 = vmatpush2.msra.mxu0 0.0
        %739 = vmatprep.subr.mxu0 0.0
        %740 = vmatpush2.msra.mxu0 0.0
        %741 = vmatprep.subr.mxu0 0.0
        %742 = vmatpush2.msra.mxu0 0.0
        %743 = vmatprep.subr.mxu0 0.0
        %744 = vmatpush2.msra.mxu0 0.0
        %745 = vmatprep.subr.mxu0 0.0
        %746 = vmatpush2.msra.mxu0 0.0
        %747 = vmatprep.subr.mxu0 0.0
        %748 = vmatpush2.msra.mxu0 0.0
        %749 = vmatprep.subr.mxu0 0.0
        %750 = vmatpush2.msra.mxu0 0.0
        %751 = vmatprep.subr.mxu0 0.0
        %752 = vmatpush2.msra.mxu0 0.0
        %753 = vmatprep.subr.mxu0 0.0
        %754 = vmatpush2.msra.mxu0 0.0
        %755 = vmatprep.subr.mxu0 0.0
        %756 = vmatpush2.msra.mxu0 0.0
        %757 = vmatprep.subr.mxu0 0.0
        %758 = vmatpush2.msra.mxu0 0.0
        %759 = vmatprep.subr.mxu0 0.0
        %760 = vmatpush2.msra.mxu0 0.0
        %761 = vmatprep.subr.mxu0 0.0
        %762 = vmatpush2.msra.mxu0 0.0
        %763 = vmatprep.subr.mxu0 0.0
        %764 = vmatpush2.msra.mxu0 0.0
        %765 = vmatprep.subr.mxu0 0.0
        %766 = vmatpush2.msra.mxu0 0.0
        %767 = vmatprep.mubr.f32.mxu0 0.0
        %768 = vmatmul.mubr.f32.gmra.mxu0 %v701
        %v769 = vpop.f32.mrf.mxu0
        %v770 = vadd.f32 0.0, %v769
        %v771 = vpop.f32.mrf.mxu0
        %772 = vdwg.mxu0
        %v773 = vld [vmem:[#allocation4] sm:$0xff]
        %v774 = vld [vmem:[#allocation4 + $0x8] sm:$0xff]
        %v777 = vlaneseq
        %v778 = vshrl.u32 %v777, 7
        %v779 = vsub.s32 0, %v778
        %v780 = vrot.slane %v573, %v779
        %v781 = vlaneseq
        %v782 = vshrl.u32 %v781, 7
        %v783 = vsub.s32 0, %v782
        %v784 = vrot.slane %v575, %v783
        %v787 = vmul.f32 %v780, %v773
        %v788 = vmul.f32 %v784, %v774
        %v789 = vadd.f32 %v787, %v697
        %v790 = vadd.f32 %v788, %v770
        %791 = vst.msk [vmem:[#allocation4] sm:$0xff] %vm549, %v789
        %792 = vst.msk [vmem:[#allocation4 + $0x8] sm:$0xff] %vm549, %v790
        %793 = vst.msk [vmem:[#allocation2] sm:$0x1] %vm624, %v568
        %794 = vst.msk [vmem:[#allocation2 + $0x1] sm:$0x1] %vm624, %v569
        // Predicated region
        $region49: #{tpu_custom_call.1} parent=31 // pred_check
          %p795 = pneg %p300
        $region50: #{tpu_custom_call.1} parent=31 // pred_check_branch
          %797 = sbr.rel (%p795) target = $region52
        $region51: #{tpu_custom_call.1} parent=31 // pred_region
          %v798 = vld [vmem:[#allocation3] sm:$0x1]
          %v799 = vld [vmem:[#allocation3 + $0x1] sm:$0x1]
          %v800 = vrcp.pop %v798
          %v801 = vrcp.pop %v799
          %v802 = vld [vmem:[#allocation4] sm:$0xff]
          %v803 = vld [vmem:[#allocation4 + $0x8] sm:$0xff]
          %v806 = vlaneseq
          %v807 = vshrl.u32 %v806, 7
          %v808 = vsub.s32 0, %v807
          %v809 = vrot.slane %v800, %v808
          %v810 = vlaneseq
          %v811 = vshrl.u32 %v810, 7
          %v812 = vsub.s32 0, %v811
          %v813 = vrot.slane %v801, %v812
          %v816 = vmul.f32 %v802, %v809
          %v817 = vmul.f32 %v803, %v813
          %818 = vst.msk [vmem:[%s295] sm:$0xff] %vm549, %v816
          %819 = vst.msk [vmem:[%s295 + $0x8] sm:$0xff] %vm549, %v817
        $region52: #{tpu_custom_call.1} parent=31 // pred_fallthru
          _
        %s820 = sand.u32 %s136, 1
        %s821 = scalar_lea.sflag [#allocation7], %s820
        %s822 = sand.u32 %s136, 1
        %s823 = smul.addr %s822, 16
        %s824 = scalar_lea.vmem [#allocation11], %s823
        // Predicated region
        $region53: #{tpu_custom_call.1} parent=31 // pred_check
          %p825 = pneg %p146
        $region54: #{tpu_custom_call.1} parent=31 // pred_check_branch
          %827 = sbr.rel (%p825) target = $region56
        $region55: #{tpu_custom_call.1} parent=31 // pred_region
          %s828 = smul.u32 2, %s28
          %s830 = ssub.s32 256, 256
          %831 = vsyncadd %s821, %s830
          %s832 = sadd.s32 %s29, %s828
          %s833 = smul.addr %s832, 128
          %s834 = scalar_lea.hbm %s3, %s833
          %s835 = sshll.u32 %s824, 4
          %s836 = int_to_ptr.vmem [resolvable:$true] %s835
          %841 = dma.vmem_to_hbm [thread:$0]  %s836, 256, %s834, %s821, 128, 128, 8
        $region56: #{tpu_custom_call.1} parent=31 // pred_fallthru
          _
      $region32: #{tpu_custom_call.1} parent=5 // pred_fallthru
        _
      %p842 = scmp.le.s32.totalorder 2, %s18
      // Predicated region
      $region57: #{tpu_custom_call.1} parent=5 // pred_check
        %p843 = pneg %p842
      $region58: #{tpu_custom_call.1} parent=5 // pred_check_branch
        %845 = sbr.rel (%p843) target = $region60
      $region59: #{tpu_custom_call.1} parent=5 // pred_region
        %s846 = ssub.s32 %s18, 2
        // Predicated region
        $region61: #{tpu_custom_call.1} parent=59 // pred_check
          %p847 = pneg %p152
        $region62: #{tpu_custom_call.1} parent=59 // pred_check_branch
          %849 = sbr.rel (%p847) target = $region64
        $region63: #{tpu_custom_call.1} parent=59 // pred_region
          %s850 = sand.u32 %s137, 1
          %s851 = scalar_lea.sflag [#allocation7], %s850
          %s852 = sand.u32 %s137, 1
          %s853 = smul.addr %s852, 16
          %s854 = scalar_lea.vmem [#allocation11], %s853
          %855 = dma.done %s851, 256
        $region64: #{tpu_custom_call.1} parent=59 // pred_fallthru
          _
      $region60: #{tpu_custom_call.1} parent=5 // pred_fallthru
        _
    $region6: #{tpu_custom_call.1} parent=1 // loop_footer
      %s22 = sadd.s32 1, %s18
    $region7: #{tpu_custom_call.1} parent=1 // loop_footer_branch
      %17 = sbr.rel target = $region3
    $region8: #{tpu_custom_call.1} parent=1 // loop_exit
      _
    %856 = vsyncpa [#allocation6], 1
    %s857 = scalar_lea.sflag [#allocation6], 1
    %858 = vsyncpa %s857, 1
    %859 = vsyncpa [#allocation9], 1
    %s860 = scalar_lea.sflag [#allocation9], 1
    %861 = vsyncpa %s860, 1
    %862 = vsyncpa [#allocation7], 1
    %s863 = scalar_lea.sflag [#allocation7], 1
    %864 = vsyncpa %s863, 1

</llo_original>
